<compile_context>
chip_gen: v5e
topology: v5e:2x2
jax: 0.10.0
libtpu: 0.0.40
codegen_flags: <defaults>
</compile_context>

<pallas_src>
import jax
import jax.numpy as jnp
from jax.experimental import pallas as pl
from jax.experimental.pallas import tpu as pltpu


def _round_up(n: int, m: int) -> int:
    return (n + m - 1) // m * m


def qnet_kernel(x_ref, wc_ref, bc_ref, w1_ref, b1_ref, w2_ref, b2_ref, out_ref):
    # x_ref : (TB, Kp)  bf16   one batch tile of the flattened board
    # wc_ref: (Kp, Hp)  bf16,  bc_ref: (1, Hp) f32
    # w1_ref: (Hp, Hp)  bf16,  b1_ref: (1, Hp) f32
    # w2_ref: (Hp, Ap)  bf16,  b2_ref: (1, Ap) f32
    # out_ref: (TB, Ap) f32   (lane-dense, padded; wrapper slices [:, :A])
    x = x_ref[...]

    # "conv" layer == full-board dot product (f32 MXU accumulation).
    h0 = jnp.dot(x, wc_ref[...], preferred_element_type=jnp.float32) + bc_ref[...]

    # fc1 + ReLU. Elementwise math stays f32; only MXU operands are bf16.
    h1 = jnp.dot(h0.astype(w1_ref.dtype), w1_ref[...],
                 preferred_element_type=jnp.float32) + b1_ref[...]
    h1 = jnp.maximum(h1, 0.0)

    # fc2 (output columns padded to 128 -> unmasked stores).
    out = jnp.dot(h1.astype(w2_ref.dtype), w2_ref[...],
                  preferred_element_type=jnp.float32) + b2_ref[...]
    out_ref[...] = out.astype(out_ref.dtype)


def qnetwork_forward(state, params, *, max_batch_tile=256):
    """state: (B, 1, G, G) float32 (NCHW, matching PyTorch). Returns (B, A) f32."""
    wc, bc, w1, b1, w2, b2 = params
    B = state.shape[0]
    G = state.shape[2]
    K = G * G
    H = w1.shape[0]
    A = w2.shape[1]

    # Lane-dense padded sizes.
    Kp = _round_up(K, 128)
    Hp = _round_up(max(H, 128), 128)
    Ap = _round_up(max(A, 128), 128)

    # Batch tile: multiple of 8 sublanes; stream tiles for large replay batches.
    B8 = _round_up(max(B, 8), 8)
    if B8 <= max_batch_tile:
        TB, Bp = B8, B8
    else:
        TB = max_batch_tile
        Bp = _round_up(B, TB)
    n_tiles = Bp // TB

    # ---- wrapper glue: flatten board, zero-pad, cast MXU operands to bf16 ----
    x = state.reshape(B, K).astype(jnp.float32)
    x = jnp.pad(x, ((0, Bp - B), (0, Kp - K))).astype(jnp.bfloat16)

    def pad2(a, rows, cols):
        a = a.astype(jnp.float32)
        return jnp.pad(a, ((0, rows - a.shape[0]), (0, cols - a.shape[1])))

    wc_p = pad2(wc, Kp, Hp).astype(jnp.bfloat16)
    w1_p = pad2(w1, Hp, Hp).astype(jnp.bfloat16)
    w2_p = pad2(w2, Hp, Ap).astype(jnp.bfloat16)
    bc_p = pad2(bc, 1, Hp)   # biases stay f32
    b1_p = pad2(b1, 1, Hp)
    b2_p = pad2(b2, 1, Ap)

    # x/out tiles indexed by the batch program id; weights use a constant
    # index_map so they are DMA'd once and stay VMEM-resident across tiles.
    x_spec = pl.BlockSpec((TB, Kp), lambda i: (i, 0))
    out_spec = pl.BlockSpec((TB, Ap), lambda i: (i, 0))
    resident = lambda shape: pl.BlockSpec(shape, lambda i: (0, 0))

    flops = 2 * Bp * (Kp * Hp + Hp * Hp + Hp * Ap)
    bytes_accessed = (
        Bp * Kp * 2                                   # x tiles (bf16)
        + (Kp * Hp + Hp * Hp + Hp * Ap) * 2           # weights (bf16)
        + (Hp + Hp + Ap) * 4                          # biases (f32)
        + Bp * Ap * 4                                 # output (f32)
    )

    out_padded = pl.pallas_call(
        qnet_kernel,
        out_shape=jax.ShapeDtypeStruct((Bp, Ap), jnp.float32),
        grid=(n_tiles,),
        in_specs=[
            x_spec,
            resident((Kp, Hp)),
            resident((1, Hp)),
            resident((Hp, Hp)),
            resident((1, Hp)),
            resident((Hp, Ap)),
            resident((1, Ap)),
        ],
        out_specs=out_spec,
        compiler_params=pltpu.CompilerParams(
            dimension_semantics=("parallel",),   # megacore batch split on v7x
        ),
        cost_estimate=pl.CostEstimate(
            flops=flops, transcendentals=0, bytes_accessed=bytes_accessed),
    )(x, wc_p, bc_p, w1_p, b1_p, w2_p, b2_p)

    return out_padded[:B, :A]


def init_params(key, hid_size, game_size, action_size):
    """Deterministic parameter init (uniform, PyTorch-style fan_in bounds)."""
    ks = jax.random.split(key, 6)
    fan_conv = game_size * game_size          # in_channels * kH * kW
    fan_fc1 = hid_size
    fan_fc2 = hid_size

    def u(k, shape, fan):
        bound = 1.0 / jnp.sqrt(fan)
        return jax.random.uniform(k, shape, jnp.float32, -bound, bound)

    # Stored as (in_features, out_features) => PyTorch weight transposed.
    wc = u(ks[0], (game_size * game_size, hid_size), fan_conv)
    bc = u(ks[1], (1, hid_size), fan_conv)
    w1 = u(ks[2], (hid_size, hid_size), fan_fc1)
    b1 = u(ks[3], (1, hid_size), fan_fc1)
    w2 = u(ks[4], (hid_size, action_size), fan_fc2)
    b2 = u(ks[5], (1, action_size), fan_fc2)
    return (wc, bc, w1, b1, w2, b2)


def reference_forward(state, params):
    """Pure-JAX reference with the same bf16-operand / f32-accumulate recipe."""
    wc, bc, w1, b1, w2, b2 = params
    B = state.shape[0]
    x = state.reshape(B, -1).astype(jnp.bfloat16)
    h0 = jnp.dot(x, wc.astype(jnp.bfloat16),
                 preferred_element_type=jnp.float32) + bc
    h1 = jnp.dot(h0.astype(jnp.bfloat16), w1.astype(jnp.bfloat16),
                 preferred_element_type=jnp.float32) + b1
    h1 = jnp.maximum(h1, 0.0)
    return jnp.dot(h1.astype(jnp.bfloat16), w2.astype(jnp.bfloat16),
                   preferred_element_type=jnp.float32) + b2


if __name__ == "__main__":
    hid_size = 32
    game_size = 16
    action_size = 4

    key = jax.random.PRNGKey(0)
    k_state, k_params, k_big = jax.random.split(key, 3)
    params = init_params(k_params, hid_size, game_size, action_size)

    # Small-shape check (B=2), matching the module contract.
    state = jax.random.normal(k_state, (2, 1, game_size, game_size), jnp.float32)
    out = jax.block_until_ready(qnetwork_forward(state, params))
    ref = reference_forward(state, params)
    assert out.shape == (2, action_size)
    assert jnp.allclose(out, ref, atol=2e-3, rtol=2e-3)

    # Multi-tile check: a DQN-style replay batch that doesn't divide the tile,
    # exercising the batch grid, padding, and resident-weight pipeline.
    state_big = jax.random.normal(k_big, (300, 1, game_size, game_size), jnp.float32)
    out_big = jax.block_until_ready(qnetwork_forward(state_big, params))
    ref_big = reference_forward(state_big, params)
    assert out_big.shape == (300, action_size)
    assert jnp.allclose(out_big, ref_big, atol=2e-3, rtol=2e-3)

    print("KERNEL_OK")
</pallas_src>

<mosaic_0001>
module attributes {stable_mosaic.version = 11 : i64} {
  func.func @qnet_kernel(%arg0: i32, %arg1: memref<8x256xbf16, #tpu.memory_space<vmem>>, %arg2: memref<256x128xbf16, #tpu.memory_space<vmem>>, %arg3: memref<1x128xf32, #tpu.memory_space<vmem>>, %arg4: memref<128x128xbf16, #tpu.memory_space<vmem>>, %arg5: memref<1x128xf32, #tpu.memory_space<vmem>>, %arg6: memref<128x128xbf16, #tpu.memory_space<vmem>>, %arg7: memref<1x128xf32, #tpu.memory_space<vmem>>, %arg8: memref<8x128xf32, #tpu.memory_space<vmem>>) attributes {dimension_semantics = [#tpu.dimension_semantics<parallel>], iteration_bounds = array<i64: 1>, scalar_prefetch = 0 : i64, scratch_operands = 0 : i64, tpu.core_type = #tpu.core_type<tc>, window_params = [{transform_indices = @transform_0, window_bounds = array<i64: 8, 256>}, {pipeline_mode = #tpu.pipeline_mode<synchronous>, transform_indices = @transform_1, window_bounds = array<i64: 256, 128>}, {pipeline_mode = #tpu.pipeline_mode<synchronous>, transform_indices = @transform_2, window_bounds = array<i64: 1, 128>}, {pipeline_mode = #tpu.pipeline_mode<synchronous>, transform_indices = @transform_3, window_bounds = array<i64: 128, 128>}, {pipeline_mode = #tpu.pipeline_mode<synchronous>, transform_indices = @transform_4, window_bounds = array<i64: 1, 128>}, {pipeline_mode = #tpu.pipeline_mode<synchronous>, transform_indices = @transform_5, window_bounds = array<i64: 128, 128>}, {pipeline_mode = #tpu.pipeline_mode<synchronous>, transform_indices = @transform_6, window_bounds = array<i64: 1, 128>}, {transform_indices = @transform_7, window_bounds = array<i64: 8, 128>}]} {
    %c0 = arith.constant 0 : index
    %c0_0 = arith.constant 0 : index
    %0 = vector.load %arg1[%c0, %c0_0] : memref<8x256xbf16, #tpu.memory_space<vmem>>, vector<8x256xbf16>
    %c0_1 = arith.constant 0 : index
    %c0_2 = arith.constant 0 : index
    %1 = vector.load %arg2[%c0_1, %c0_2] : memref<256x128xbf16, #tpu.memory_space<vmem>>, vector<256x128xbf16>
    %cst = arith.constant dense<0.000000e+00> : vector<8x128xf32>
    %2 = tpu.matmul %0, %1, %cst {dimension_numbers = #tpu.dot_dimension_numbers<[1], [0], [0], [1], [0, 0, 1, 1], [], []>} : vector<8x256xbf16>, vector<256x128xbf16>, vector<8x128xf32> -> vector<8x128xf32>
    %c0_3 = arith.constant 0 : index
    %c0_4 = arith.constant 0 : index
    %3 = vector.load %arg3[%c0_3, %c0_4] : memref<1x128xf32, #tpu.memory_space<vmem>>, vector<1x128xf32>
    %4 = vector.broadcast %3 : vector<1x128xf32> to vector<8x128xf32>
    %5 = arith.addf %2, %4 : vector<8x128xf32>
    %6 = arith.truncf %5 : vector<8x128xf32> to vector<8x128xbf16>
    %c0_5 = arith.constant 0 : index
    %c0_6 = arith.constant 0 : index
    %7 = vector.load %arg4[%c0_5, %c0_6] : memref<128x128xbf16, #tpu.memory_space<vmem>>, vector<128x128xbf16>
    %cst_7 = arith.constant dense<0.000000e+00> : vector<8x128xf32>
    %8 = tpu.matmul %6, %7, %cst_7 {dimension_numbers = #tpu.dot_dimension_numbers<[1], [0], [0], [1], [0, 0, 1, 1], [], []>} : vector<8x128xbf16>, vector<128x128xbf16>, vector<8x128xf32> -> vector<8x128xf32>
    %c0_8 = arith.constant 0 : index
    %c0_9 = arith.constant 0 : index
    %9 = vector.load %arg5[%c0_8, %c0_9] : memref<1x128xf32, #tpu.memory_space<vmem>>, vector<1x128xf32>
    %10 = vector.broadcast %9 : vector<1x128xf32> to vector<8x128xf32>
    %11 = arith.addf %8, %10 : vector<8x128xf32>
    %cst_10 = arith.constant 0.000000e+00 : f32
    %12 = vector.broadcast %cst_10 : f32 to vector<8x128xf32>
    %13 = arith.maximumf %11, %12 : vector<8x128xf32>
    %14 = arith.truncf %13 : vector<8x128xf32> to vector<8x128xbf16>
    %c0_11 = arith.constant 0 : index
    %c0_12 = arith.constant 0 : index
    %15 = vector.load %arg6[%c0_11, %c0_12] : memref<128x128xbf16, #tpu.memory_space<vmem>>, vector<128x128xbf16>
    %cst_13 = arith.constant dense<0.000000e+00> : vector<8x128xf32>
    %16 = tpu.matmul %14, %15, %cst_13 {dimension_numbers = #tpu.dot_dimension_numbers<[1], [0], [0], [1], [0, 0, 1, 1], [], []>} : vector<8x128xbf16>, vector<128x128xbf16>, vector<8x128xf32> -> vector<8x128xf32>
    %c0_14 = arith.constant 0 : index
    %c0_15 = arith.constant 0 : index
    %17 = vector.load %arg7[%c0_14, %c0_15] : memref<1x128xf32, #tpu.memory_space<vmem>>, vector<1x128xf32>
    %18 = vector.broadcast %17 : vector<1x128xf32> to vector<8x128xf32>
    %19 = arith.addf %16, %18 : vector<8x128xf32>
    %c0_16 = arith.constant 0 : index
    %c0_17 = arith.constant 0 : index
    %20 = vector.load %arg8[%c0_16, %c0_17] : memref<8x128xf32, #tpu.memory_space<vmem>>, vector<8x128xf32>
    tpu.vector_store %arg8[%c0_16, %c0_17], %19 {strides = array<i32>} : memref<8x128xf32, #tpu.memory_space<vmem>>, vector<8x128xf32>,
    return
  }
  func.func @transform_0(%arg0: i32) -> (i32, i32) {
    %c0_i32 = arith.constant 0 : i32
    %c0_i32_0 = arith.constant 0 : i32
    return %arg0, %c0_i32 : i32, i32
  }
  func.func @transform_1(%arg0: i32) -> (i32, i32) {
    %c0_i32 = arith.constant 0 : i32
    %c0_i32_0 = arith.constant 0 : i32
    %c0_i32_1 = arith.constant 0 : i32
    return %c0_i32, %c0_i32_0 : i32, i32
  }
  func.func @transform_2(%arg0: i32) -> (i32, i32) {
    %c0_i32 = arith.constant 0 : i32
    %c0_i32_0 = arith.constant 0 : i32
    %c0_i32_1 = arith.constant 0 : i32
    return %c0_i32, %c0_i32_0 : i32, i32
  }
  func.func @transform_3(%arg0: i32) -> (i32, i32) {
    %c0_i32 = arith.constant 0 : i32
    %c0_i32_0 = arith.constant 0 : i32
    %c0_i32_1 = arith.constant 0 : i32
    return %c0_i32, %c0_i32_0 : i32, i32
  }
  func.func @transform_4(%arg0: i32) -> (i32, i32) {
    %c0_i32 = arith.constant 0 : i32
    %c0_i32_0 = arith.constant 0 : i32
    %c0_i32_1 = arith.constant 0 : i32
    return %c0_i32, %c0_i32_0 : i32, i32
  }
  func.func @transform_5(%arg0: i32) -> (i32, i32) {
    %c0_i32 = arith.constant 0 : i32
    %c0_i32_0 = arith.constant 0 : i32
    %c0_i32_1 = arith.constant 0 : i32
    return %c0_i32, %c0_i32_0 : i32, i32
  }
  func.func @transform_6(%arg0: i32) -> (i32, i32) {
    %c0_i32 = arith.constant 0 : i32
    %c0_i32_0 = arith.constant 0 : i32
    %c0_i32_1 = arith.constant 0 : i32
    return %c0_i32, %c0_i32_0 : i32, i32
  }
  func.func @transform_7(%arg0: i32) -> (i32, i32) {
    %c0_i32 = arith.constant 0 : i32
    %c0_i32_0 = arith.constant 0 : i32
    return %arg0, %c0_i32 : i32, i32
  }
}

</mosaic_0001>

<llo_original>
// kernel: tpu_custom_call.1
$region0: #{tpu_custom_call.1}
  #allocation0 [shape = 'u32[]', space=smem, size = 0x4, offset = 0x4, fixed_abs, tag = 'smem constant byte address 0x4 - core index']
  #allocation1 [shape = 'u32[72,128]{1,0:T(1,128)}', space=vmem, size = 0x9000, scoped, tag = 'internal scratch']
  %s0 = inlined_call_operand.hbm [shape: bf16[8,256], index: 0, kind: input, shape index: {}]
  %s1 = inlined_call_operand.hbm [shape: bf16[256,128], index: 1, kind: input, shape index: {}]
  %s2 = inlined_call_operand.vmem [shape: f32[1,128], index: 2, kind: input, shape index: {}]
  %s3 = inlined_call_operand.hbm [shape: bf16[128,128], index: 3, kind: input, shape index: {}]
  %s4 = inlined_call_operand.vmem [shape: f32[1,128], index: 4, kind: input, shape index: {}]
  %s5 = inlined_call_operand.hbm [shape: bf16[128,128], index: 5, kind: input, shape index: {}]
  %s6 = inlined_call_operand.vmem [shape: f32[1,128], index: 6, kind: input, shape index: {}]
  %s7 = inlined_call_operand.hbm [shape: f32[8,128], index: 7, kind: output, shape index: {}]
  %s8 = sld [smem:[#allocation0]]
  $region54: #{tpu_custom_call.1} parent=0
    _
  %s10 = ssub.s32 1, %s8
  %s11 = scalar_select 0, %s10, %s8
  $region1: #{tpu_custom_call.1} parent=0
    #allocation2 [shape = 'u8[4096]{0}', space=vmem, size = 0x1000, scoped, tag = 'input window, operand 0, single buffered']
    #allocation3 [shape = 's32[1]{0}', space=sflag, size = 0x4, scoped, tag = 'scoped memory for tpu_custom_call.1']
    #allocation4 [shape = 's32[1]{0}', space=sflag, size = 0x4, scoped, tag = 'scoped memory for tpu_custom_call.1']
    #allocation5 [shape = 'u8[65536]{0}', space=vmem, size = 0x10000, scoped, tag = 'input window, operand 1, single buffered']
    #allocation6 [shape = 's32[1]{0}', space=sflag, size = 0x4, scoped, tag = 'scoped memory for tpu_custom_call.1']
    #allocation7 [shape = 'u8[32768]{0}', space=vmem, size = 0x8000, scoped, tag = 'input window, operand 3, single buffered']
    #allocation8 [shape = 'u8[32768]{0}', space=vmem, size = 0x8000, scoped, tag = 'input window, operand 5, single buffered']
    #allocation9 [shape = 's32[1]{0}', space=sflag, size = 0x4, scoped, tag = 'scoped memory for tpu_custom_call.1']
    #allocation10 [shape = 'u8[4096]{0}', space=vmem, size = 0x1000, scoped, tag = 'output window, operand 0, single buffered']
    %12 = vsyncpa [#allocation3], 0
    %13 = vsyncpa [#allocation6], 0
    %14 = vsyncpa [#allocation9], 0
    %15 = vsyncpa [#allocation4], 0
    // Predicated region
    $region2: #{tpu_custom_call.1} parent=1 // pred_check
      _
    $region3: #{tpu_custom_call.1} parent=1 // pred_check_branch
      %17 = sbr.rel (0) target = $region5
    $region4: #{tpu_custom_call.1} parent=1 // pred_region
      %19 = vsyncadd [#allocation3], 0
      %s21 = sshll.u32 %s0, 4
      %s22 = int_to_ptr.hbm [resolvable:$true] %s21
      %s23 = sshll.u32 [#allocation2], 4
      %s24 = int_to_ptr.vmem [resolvable:$true] %s23
      %26 = dma.hbm_to_vmem [thread:$0]  %s22, 128, %s24, [#allocation3]
    $region5: #{tpu_custom_call.1} parent=1 // pred_fallthru
      _
    // Predicated region
    $region6: #{tpu_custom_call.1} parent=1 // pred_check
      _
    $region7: #{tpu_custom_call.1} parent=1 // pred_check_branch
      %28 = sbr.rel (0) target = $region9
    $region8: #{tpu_custom_call.1} parent=1 // pred_region
      %30 = vsyncadd [#allocation6], 0
      %s31 = sshll.u32 %s1, 4
      %s32 = int_to_ptr.hbm [resolvable:$true] %s31
      %s33 = sshll.u32 [#allocation5], 4
      %s34 = int_to_ptr.vmem [resolvable:$true] %s33
      %39 = dma.hbm_to_vmem [thread:$0]  %s32, 2048, %s34, [#allocation6], 64, 64, 4
    $region9: #{tpu_custom_call.1} parent=1 // pred_fallthru
      _
    // Predicated region
    $region10: #{tpu_custom_call.1} parent=1 // pred_check
      _
    $region11: #{tpu_custom_call.1} parent=1 // pred_check_branch
      %41 = sbr.rel (0) target = $region13
    $region12: #{tpu_custom_call.1} parent=1 // pred_region
      _
    $region13: #{tpu_custom_call.1} parent=1 // pred_fallthru
      _
    // Predicated region
    $region14: #{tpu_custom_call.1} parent=1 // pred_check
      _
    $region15: #{tpu_custom_call.1} parent=1 // pred_check_branch
      %43 = sbr.rel (0) target = $region17
    $region16: #{tpu_custom_call.1} parent=1 // pred_region
      %45 = vsyncadd [#allocation6], 0
      %s46 = sshll.u32 %s3, 4
      %s47 = int_to_ptr.hbm [resolvable:$true] %s46
      %s48 = sshll.u32 [#allocation7], 4
      %s49 = int_to_ptr.vmem [resolvable:$true] %s48
      %54 = dma.hbm_to_vmem [thread:$0]  %s47, 1024, %s49, [#allocation6], 64, 64, 4
    $region17: #{tpu_custom_call.1} parent=1 // pred_fallthru
      _
    // Predicated region
    $region18: #{tpu_custom_call.1} parent=1 // pred_check
      _
    $region19: #{tpu_custom_call.1} parent=1 // pred_check_branch
      %56 = sbr.rel (0) target = $region21
    $region20: #{tpu_custom_call.1} parent=1 // pred_region
      _
    $region21: #{tpu_custom_call.1} parent=1 // pred_fallthru
      _
    // Predicated region
    $region22: #{tpu_custom_call.1} parent=1 // pred_check
      _
    $region23: #{tpu_custom_call.1} parent=1 // pred_check_branch
      %58 = sbr.rel (0) target = $region25
    $region24: #{tpu_custom_call.1} parent=1 // pred_region
      %60 = vsyncadd [#allocation9], 0
      %s61 = sshll.u32 %s5, 4
      %s62 = int_to_ptr.hbm [resolvable:$true] %s61
      %s63 = sshll.u32 [#allocation8], 4
      %s64 = int_to_ptr.vmem [resolvable:$true] %s63
      %69 = dma.hbm_to_vmem [thread:$0]  %s62, 1024, %s64, [#allocation9], 64, 64, 4
    $region25: #{tpu_custom_call.1} parent=1 // pred_fallthru
      _
    // Predicated region
    $region26: #{tpu_custom_call.1} parent=1 // pred_check
      _
    $region27: #{tpu_custom_call.1} parent=1 // pred_check_branch
      %71 = sbr.rel (0) target = $region29
    $region28: #{tpu_custom_call.1} parent=1 // pred_region
      _
    $region29: #{tpu_custom_call.1} parent=1 // pred_fallthru
      _
    // Predicated region
    $region30: #{tpu_custom_call.1} parent=1 // pred_check
      _
    $region31: #{tpu_custom_call.1} parent=1 // pred_check_branch
      %73 = sbr.rel (0) target = $region33
    $region32: #{tpu_custom_call.1} parent=1 // pred_region
      %75 = dma.done [#allocation3], 128
    $region33: #{tpu_custom_call.1} parent=1 // pred_fallthru
      _
    // Predicated region
    $region34: #{tpu_custom_call.1} parent=1 // pred_check
      _
    $region35: #{tpu_custom_call.1} parent=1 // pred_check_branch
      %77 = sbr.rel (0) target = $region37
    $region36: #{tpu_custom_call.1} parent=1 // pred_region
      %79 = dma.done [#allocation6], 2048
    $region37: #{tpu_custom_call.1} parent=1 // pred_fallthru
      _
    // Predicated region
    $region38: #{tpu_custom_call.1} parent=1 // pred_check
      _
    $region39: #{tpu_custom_call.1} parent=1 // pred_check_branch
      %81 = sbr.rel (0) target = $region41
    $region40: #{tpu_custom_call.1} parent=1 // pred_region
      %83 = dma.done [#allocation6], 1024
    $region41: #{tpu_custom_call.1} parent=1 // pred_fallthru
      _
    // Predicated region
    $region42: #{tpu_custom_call.1} parent=1 // pred_check
      _
    $region43: #{tpu_custom_call.1} parent=1 // pred_check_branch
      %85 = sbr.rel (0) target = $region45
    $region44: #{tpu_custom_call.1} parent=1 // pred_region
      %87 = dma.done [#allocation9], 1024
    $region45: #{tpu_custom_call.1} parent=1 // pred_fallthru
      _
    %v88 = vld [vmem:[#allocation2] sm:$0xff]
    %v89 = vld [vmem:[#allocation5] sm:$0xf]
    %v90 = vld [vmem:[#allocation5 + $0x4] sm:$0xf]
    %v91 = vld [vmem:[#allocation5 + $0x8] sm:$0xf]
    %v92 = vld [vmem:[#allocation5 + $0xc] sm:$0xf]
    %v93 = vld [vmem:[#allocation5 + $0x10] sm:$0xf]
    %v94 = vld [vmem:[#allocation5 + $0x14] sm:$0xf]
    %v95 = vld [vmem:[#allocation5 + $0x18] sm:$0xf]
    %v96 = vld [vmem:[#allocation5 + $0x1c] sm:$0xf]
    %v97 = vld [vmem:[#allocation5 + $0x20] sm:$0xf]
    %v98 = vld [vmem:[#allocation5 + $0x24] sm:$0xf]
    %v99 = vld [vmem:[#allocation5 + $0x28] sm:$0xf]
    %v100 = vld [vmem:[#allocation5 + $0x2c] sm:$0xf]
    %v101 = vld [vmem:[#allocation5 + $0x30] sm:$0xf]
    %v102 = vld [vmem:[#allocation5 + $0x34] sm:$0xf]
    %v103 = vld [vmem:[#allocation5 + $0x38] sm:$0xf]
    %v104 = vld [vmem:[#allocation5 + $0x3c] sm:$0xf]
    %v105 = vld [vmem:[#allocation5 + $0x40] sm:$0xf]
    %v106 = vld [vmem:[#allocation5 + $0x44] sm:$0xf]
    %v107 = vld [vmem:[#allocation5 + $0x48] sm:$0xf]
    %v108 = vld [vmem:[#allocation5 + $0x4c] sm:$0xf]
    %v109 = vld [vmem:[#allocation5 + $0x50] sm:$0xf]
    %v110 = vld [vmem:[#allocation5 + $0x54] sm:$0xf]
    %v111 = vld [vmem:[#allocation5 + $0x58] sm:$0xf]
    %v112 = vld [vmem:[#allocation5 + $0x5c] sm:$0xf]
    %v113 = vld [vmem:[#allocation5 + $0x60] sm:$0xf]
    %v114 = vld [vmem:[#allocation5 + $0x64] sm:$0xf]
    %v115 = vld [vmem:[#allocation5 + $0x68] sm:$0xf]
    %v116 = vld [vmem:[#allocation5 + $0x6c] sm:$0xf]
    %v117 = vld [vmem:[#allocation5 + $0x70] sm:$0xf]
    %v118 = vld [vmem:[#allocation5 + $0x74] sm:$0xf]
    %v119 = vld [vmem:[#allocation5 + $0x78] sm:$0xf]
    %v120 = vld [vmem:[#allocation5 + $0x7c] sm:$0xf]
    %v121 = vld [vmem:[%s2] sm:$0x1]
    %v123 = vperm.slane %v121, 0
    %v126 = vunpack.c.l.b16 %v88
    %v127 = vunpack.c.h.b16 %v88
    %v128 = vpack.c.b16 %v126, %v126
    %v129 = vpack.c.b16 %v127, %v127
    %v164 = vunpack.c.l.b16 %v89
    %v165 = vunpack.c.l.b16 %v90
    %v166 = vunpack.c.l.b16 %v91
    %v167 = vunpack.c.l.b16 %v92
    %v168 = vunpack.c.l.b16 %v93
    %v169 = vunpack.c.l.b16 %v94
    %v170 = vunpack.c.l.b16 %v95
    %v171 = vunpack.c.l.b16 %v96
    %v172 = vunpack.c.l.b16 %v97
    %v173 = vunpack.c.l.b16 %v98
    %v174 = vunpack.c.l.b16 %v99
    %v175 = vunpack.c.l.b16 %v100
    %v176 = vunpack.c.l.b16 %v101
    %v177 = vunpack.c.l.b16 %v102
    %v178 = vunpack.c.l.b16 %v103
    %v179 = vunpack.c.l.b16 %v104
    %v180 = vunpack.c.l.b16 %v105
    %v181 = vunpack.c.l.b16 %v106
    %v182 = vunpack.c.l.b16 %v107
    %v183 = vunpack.c.l.b16 %v108
    %v184 = vunpack.c.l.b16 %v109
    %v185 = vunpack.c.l.b16 %v110
    %v186 = vunpack.c.l.b16 %v111
    %v187 = vunpack.c.l.b16 %v112
    %v188 = vunpack.c.l.b16 %v113
    %v189 = vunpack.c.l.b16 %v114
    %v190 = vunpack.c.l.b16 %v115
    %v191 = vunpack.c.l.b16 %v116
    %v192 = vunpack.c.l.b16 %v117
    %v193 = vunpack.c.l.b16 %v118
    %v194 = vunpack.c.l.b16 %v119
    %v195 = vunpack.c.l.b16 %v120
    %v196 = vpack.c.b16 %v165, %v164
    %v197 = vpack.c.b16 %v167, %v166
    %v198 = vpack.c.b16 %v169, %v168
    %v199 = vpack.c.b16 %v171, %v170
    %v200 = vpack.c.b16 %v173, %v172
    %v201 = vpack.c.b16 %v175, %v174
    %v202 = vpack.c.b16 %v177, %v176
    %v203 = vpack.c.b16 %v179, %v178
    %v204 = vpack.c.b16 %v181, %v180
    %v205 = vpack.c.b16 %v183, %v182
    %v206 = vpack.c.b16 %v185, %v184
    %v207 = vpack.c.b16 %v187, %v186
    %v208 = vpack.c.b16 %v189, %v188
    %v209 = vpack.c.b16 %v191, %v190
    %v210 = vpack.c.b16 %v193, %v192
    %v211 = vpack.c.b16 %v195, %v194
    %228 = vmatpush.bf16.msra.mxu0 %v203
    %229 = vmatpush.bf16.msra.mxu0 %v202
    %230 = vmatpush.bf16.msra.mxu0 %v201
    %231 = vmatpush.bf16.msra.mxu0 %v200
    %232 = vmatpush.bf16.msra.mxu0 %v199
    %233 = vmatpush.bf16.msra.mxu0 %v198
    %234 = vmatpush.bf16.msra.mxu0 %v197
    %235 = vmatpush.bf16.msra.mxu0 %v196
    %236 = vmatmul.bf16.gmra.mxu0 %v128
    %v237 = vpop.f32.mrf.mxu0
    %v238 = vadd.f32 %v123, %v237
    %v239 = vpop.f32.mrf.mxu0
    %240 = vdwg.mxu0
    %241 = vmatpush.bf16.msra.mxu0 %v211
    %242 = vmatpush.bf16.msra.mxu0 %v210
    %243 = vmatpush.bf16.msra.mxu0 %v209
    %244 = vmatpush.bf16.msra.mxu0 %v208
    %245 = vmatpush.bf16.msra.mxu0 %v207
    %246 = vmatpush.bf16.msra.mxu0 %v206
    %247 = vmatpush.bf16.msra.mxu0 %v205
    %248 = vmatpush.bf16.msra.mxu0 %v204
    %249 = vmatmul.bf16.gmra.mxu0 %v129
    %v250 = vpop.f32.mrf.mxu0
    %v251 = vadd.f32 %v238, %v250
    %v252 = vpop.f32.mrf.mxu0
    %253 = vdwg.mxu0
    %v254 = vpack.c.bf16 %v251, %v251
    %v255 = vld [vmem:[#allocation7] sm:$0xf]
    %v256 = vld [vmem:[#allocation7 + $0x4] sm:$0xf]
    %v257 = vld [vmem:[#allocation7 + $0x8] sm:$0xf]
    %v258 = vld [vmem:[#allocation7 + $0xc] sm:$0xf]
    %v259 = vld [vmem:[#allocation7 + $0x10] sm:$0xf]
    %v260 = vld [vmem:[#allocation7 + $0x14] sm:$0xf]
    %v261 = vld [vmem:[#allocation7 + $0x18] sm:$0xf]
    %v262 = vld [vmem:[#allocation7 + $0x1c] sm:$0xf]
    %v263 = vld [vmem:[#allocation7 + $0x20] sm:$0xf]
    %v264 = vld [vmem:[#allocation7 + $0x24] sm:$0xf]
    %v265 = vld [vmem:[#allocation7 + $0x28] sm:$0xf]
    %v266 = vld [vmem:[#allocation7 + $0x2c] sm:$0xf]
    %v267 = vld [vmem:[#allocation7 + $0x30] sm:$0xf]
    %v268 = vld [vmem:[#allocation7 + $0x34] sm:$0xf]
    %v269 = vld [vmem:[#allocation7 + $0x38] sm:$0xf]
    %v270 = vld [vmem:[#allocation7 + $0x3c] sm:$0xf]
    %v271 = vld [vmem:[%s4] sm:$0x1]
    %v273 = vperm.slane %v271, 0
    %v291 = vunpack.c.l.b16 %v255
    %v292 = vunpack.c.l.b16 %v256
    %v293 = vunpack.c.l.b16 %v257
    %v294 = vunpack.c.l.b16 %v258
    %v295 = vunpack.c.l.b16 %v259
    %v296 = vunpack.c.l.b16 %v260
    %v297 = vunpack.c.l.b16 %v261
    %v298 = vunpack.c.l.b16 %v262
    %v299 = vunpack.c.l.b16 %v263
    %v300 = vunpack.c.l.b16 %v264
    %v301 = vunpack.c.l.b16 %v265
    %v302 = vunpack.c.l.b16 %v266
    %v303 = vunpack.c.l.b16 %v267
    %v304 = vunpack.c.l.b16 %v268
    %v305 = vunpack.c.l.b16 %v269
    %v306 = vunpack.c.l.b16 %v270
    %v307 = vpack.c.b16 %v292, %v291
    %v308 = vpack.c.b16 %v294, %v293
    %v309 = vpack.c.b16 %v296, %v295
    %v310 = vpack.c.b16 %v298, %v297
    %v311 = vpack.c.b16 %v300, %v299
    %v312 = vpack.c.b16 %v302, %v301
    %v313 = vpack.c.b16 %v304, %v303
    %v314 = vpack.c.b16 %v306, %v305
    %323 = vmatpush.bf16.msra.mxu0 %v314
    %324 = vmatpush.bf16.msra.mxu0 %v313
    %325 = vmatpush.bf16.msra.mxu0 %v312
    %326 = vmatpush.bf16.msra.mxu0 %v311
    %327 = vmatpush.bf16.msra.mxu0 %v310
    %328 = vmatpush.bf16.msra.mxu0 %v309
    %329 = vmatpush.bf16.msra.mxu0 %v308
    %330 = vmatpush.bf16.msra.mxu0 %v307
    %331 = vmatmul.bf16.gmra.mxu0 %v254
    %v332 = vpop.f32.mrf.mxu0
    %v333 = vadd.f32 %v273, %v332
    %v334 = vpop.f32.mrf.mxu0
    %335 = vdwg.mxu0
    %v336 = vmax.f32 %v333, 0.0
    %v337 = vpack.c.bf16 %v336, %v336
    %v338 = vld [vmem:[#allocation8] sm:$0xf]
    %v339 = vld [vmem:[#allocation8 + $0x4] sm:$0xf]
    %v340 = vld [vmem:[#allocation8 + $0x8] sm:$0xf]
    %v341 = vld [vmem:[#allocation8 + $0xc] sm:$0xf]
    %v342 = vld [vmem:[#allocation8 + $0x10] sm:$0xf]
    %v343 = vld [vmem:[#allocation8 + $0x14] sm:$0xf]
    %v344 = vld [vmem:[#allocation8 + $0x18] sm:$0xf]
    %v345 = vld [vmem:[#allocation8 + $0x1c] sm:$0xf]
    %v346 = vld [vmem:[#allocation8 + $0x20] sm:$0xf]
    %v347 = vld [vmem:[#allocation8 + $0x24] sm:$0xf]
    %v348 = vld [vmem:[#allocation8 + $0x28] sm:$0xf]
    %v349 = vld [vmem:[#allocation8 + $0x2c] sm:$0xf]
    %v350 = vld [vmem:[#allocation8 + $0x30] sm:$0xf]
    %v351 = vld [vmem:[#allocation8 + $0x34] sm:$0xf]
    %v352 = vld [vmem:[#allocation8 + $0x38] sm:$0xf]
    %v353 = vld [vmem:[#allocation8 + $0x3c] sm:$0xf]
    %v354 = vld [vmem:[%s6] sm:$0x1]
    %v356 = vperm.slane %v354, 0
    %v374 = vunpack.c.l.b16 %v338
    %v375 = vunpack.c.l.b16 %v339
    %v376 = vunpack.c.l.b16 %v340
    %v377 = vunpack.c.l.b16 %v341
    %v378 = vunpack.c.l.b16 %v342
    %v379 = vunpack.c.l.b16 %v343
    %v380 = vunpack.c.l.b16 %v344
    %v381 = vunpack.c.l.b16 %v345
    %v382 = vunpack.c.l.b16 %v346
    %v383 = vunpack.c.l.b16 %v347
    %v384 = vunpack.c.l.b16 %v348
    %v385 = vunpack.c.l.b16 %v349
    %v386 = vunpack.c.l.b16 %v350
    %v387 = vunpack.c.l.b16 %v351
    %v388 = vunpack.c.l.b16 %v352
    %v389 = vunpack.c.l.b16 %v353
    %v390 = vpack.c.b16 %v375, %v374
    %v391 = vpack.c.b16 %v377, %v376
    %v392 = vpack.c.b16 %v379, %v378
    %v393 = vpack.c.b16 %v381, %v380
    %v394 = vpack.c.b16 %v383, %v382
    %v395 = vpack.c.b16 %v385, %v384
    %v396 = vpack.c.b16 %v387, %v386
    %v397 = vpack.c.b16 %v389, %v388
    %406 = vmatpush.bf16.msra.mxu0 %v397
    %407 = vmatpush.bf16.msra.mxu0 %v396
    %408 = vmatpush.bf16.msra.mxu0 %v395
    %409 = vmatpush.bf16.msra.mxu0 %v394
    %410 = vmatpush.bf16.msra.mxu0 %v393
    %411 = vmatpush.bf16.msra.mxu0 %v392
    %412 = vmatpush.bf16.msra.mxu0 %v391
    %413 = vmatpush.bf16.msra.mxu0 %v390
    %414 = vmatmul.bf16.gmra.mxu0 %v337
    %v415 = vpop.f32.mrf.mxu0
    %v416 = vadd.f32 %v356, %v415
    %v417 = vpop.f32.mrf.mxu0
    %418 = vdwg.mxu0
    %419 = vst [vmem:[#allocation10] sm:$0xff] %v416
    // Predicated region
    $region46: #{tpu_custom_call.1} parent=1 // pred_check
      _
    $region47: #{tpu_custom_call.1} parent=1 // pred_check_branch
      %421 = sbr.rel (0) target = $region49
    $region48: #{tpu_custom_call.1} parent=1 // pred_region
      %423 = vsyncadd [#allocation4], 0
      %s425 = sshll.u32 [#allocation10], 4
      %s426 = int_to_ptr.vmem [resolvable:$true] %s425
      %s427 = sshll.u32 %s7, 4
      %s428 = int_to_ptr.hbm [resolvable:$true] %s427
      %430 = dma.vmem_to_hbm [thread:$0]  %s426, 128, %s428, [#allocation4]
    $region49: #{tpu_custom_call.1} parent=1 // pred_fallthru
      _
    // Predicated region
    $region50: #{tpu_custom_call.1} parent=1 // pred_check
      _
    $region51: #{tpu_custom_call.1} parent=1 // pred_check_branch
      %432 = sbr.rel (0) target = $region53
    $region52: #{tpu_custom_call.1} parent=1 // pred_region
      %434 = dma.done [#allocation4], 128
    $region53: #{tpu_custom_call.1} parent=1 // pred_fallthru
      _
    %435 = vsyncpa [#allocation3], 1
    %436 = vsyncpa [#allocation6], 1
    %437 = vsyncpa [#allocation9], 1
    %438 = vsyncpa [#allocation4], 1

</llo_original>
